<compile_context>
chip_gen: v5e
topology: v5e:2x2
jax: 0.10.0
libtpu: 0.0.40
codegen_flags: <defaults>
</compile_context>

<pallas_src>
import math

import numpy as np
import jax
import jax.numpy as jnp
from jax import lax
from jax.experimental import pallas as pl
from jax.experimental.pallas import tpu as pltpu


_VPU_F_MAX = 64            # use the VPU (L-in-lanes) path when F = C*K is this small
_VMEM_BUDGET = 24 << 20    # target for the double-buffered per-step working set


def _round_up(x, m):
    return ((x + m - 1) // m) * m


def _pick_l_tile(per_l_bytes, L, budget_bytes, quant):
    """Pick the L tile so the (already double-buffered) working set fits the budget.

    quant = 128 when L is the lane axis (VPU path), 8 when L is a leading batch dim
    (MXU path).  Single full-extent block (zero L padding) for small L; otherwise tile
    in multiples of `quant`, capped at half the extent so the parallel grid has >= 2
    steps (v7x megacore)."""
    per_l_bytes = max(int(per_l_bytes), 1)
    if L * per_l_bytes <= budget_bytes and L <= 2 * quant:
        return L, L
    Lq = _round_up(L, quant)
    t = (budget_bytes // per_l_bytes) // quant * quant
    t = max(quant, t)
    t = min(t, max(quant, (Lq // 2) // quant * quant))
    return t, _round_up(L, t)


# --------------------------------------------------------------------------------------
# Kernels
# --------------------------------------------------------------------------------------

def _lc1d_vpu_kernel(x_ref, w_ref, b_ref, o_ref):
    # Small-F/O path, L on the lane axis.
    # x_ref: (F, B, Lt)  w_ref: (F, O, Lt)  b_ref: (O, Lt) [f32]  o_ref: (B, O, Lt)
    x = x_ref[...].astype(jnp.float32)
    w = w_ref[...].astype(jnp.float32)
    acc = jnp.zeros(o_ref.shape, jnp.float32) + b_ref[...].astype(jnp.float32)[None, :, :]
    for f in range(x_ref.shape[0]):          # static unroll; F <= _VPU_F_MAX on this path
        acc = acc + x[f][:, None, :] * w[f][None, :, :]
    o_ref[...] = acc.astype(o_ref.dtype)


def _lc1d_mxu_kernel(x_ref, w_ref, b_ref, o_ref):
    # Large-F path: one MXU contraction batched over L.
    # x_ref: (Lt, Bp, Fp)  w_ref: (Lt, Fp, Ot)  b_ref: (Lt, Ot) [f32]  o_ref: (Lt, Bp, Ot)
    acc = lax.dot_general(
        x_ref[...], w_ref[...],
        dimension_numbers=(((2,), (1,)), ((0,), (0,))),   # contract F, batch L
        preferred_element_type=jnp.float32,
    )
    acc = acc + b_ref[...].astype(jnp.float32)[:, None, :]
    o_ref[...] = acc.astype(o_ref.dtype)


# --------------------------------------------------------------------------------------
# Parameter preparation (do this ONCE per module; it only depends on weight/bias)
# --------------------------------------------------------------------------------------

def prepare_locally_connected_1d(weight, bias, *, kernel_size, stride, batch_size,
                                 stream_dtype=None, vmem_budget_bytes=_VMEM_BUDGET):
    """Relayout / pad / (optionally bf16-)cast the locally-connected weight & bias once."""
    _, O, C, L, K = weight.shape
    assert K == kernel_size
    F = C * K
    B = int(batch_size)
    if bias is None:
        bias = jnp.zeros((1, O, L), weight.dtype)
    if stream_dtype is None:
        stream_dtype = weight.dtype
    stream_dtype = np.dtype(stream_dtype)
    isz = stream_dtype.itemsize

    if F <= _VPU_F_MAX:
        # ---- VPU path: L in lanes, weight streamed with zero padding inflation ----
        w_r = jnp.transpose(weight[0], (1, 3, 0, 2)).reshape(F, O, L).astype(stream_dtype)
        b_r = bias[0].astype(jnp.float32)                                       # (O, L)
        per_l = 2 * (F * B * isz + F * O * isz + O * 4 + B * O * isz) + B * O * 4
        l_tile, Lp = _pick_l_tile(per_l, L, vmem_budget_bytes, quant=128)
        w_p = jnp.pad(w_r, ((0, 0), (0, 0), (0, Lp - L)))
        b_p = jnp.pad(b_r, ((0, 0), (0, Lp - L)))
        vmem_limit = int(min(64 << 20, max(40 << 20, per_l * l_tile + (8 << 20))))
        return dict(path="vpu", w=w_p, b=b_p, B=B, C=C, O=O, L=L, K=K, F=F,
                    stride=stride, l_tile=l_tile, Lp=Lp, stream_dtype=stream_dtype,
                    vmem_limit=vmem_limit)

    # ---- MXU path: batched-over-L matmul, minimal alignment padding only ----
    Fp = _round_up(F, 8)                       # full-extent F blocks; 8-aligned sublanes
    Bp = _round_up(B, 8)
    if O >= 64:
        o_tile = min(512, _round_up(O, 128))   # lane-dense, tiled over a parallel O axis
        Op = _round_up(O, o_tile)
    else:
        o_tile = Op = _round_up(O, 8)          # small O: accept masked stores, no 128 pad
    w_r = jnp.transpose(weight[0], (2, 1, 3, 0)).reshape(L, F, O).astype(stream_dtype)
    b_r = jnp.transpose(bias[0], (1, 0)).astype(jnp.float32)                    # (L, O)
    per_l = 2 * (Bp * Fp * isz + Fp * o_tile * isz + o_tile * 4 + Bp * o_tile * isz)
    l_tile, Lp = _pick_l_tile(per_l, L, vmem_budget_bytes, quant=8)
    w_p = jnp.pad(w_r, ((0, Lp - L), (0, Fp - F), (0, Op - O)))
    b_p = jnp.pad(b_r, ((0, Lp - L), (0, Op - O)))
    vmem_limit = int(min(64 << 20, max(40 << 20, per_l * l_tile + (8 << 20))))
    # TODO(synk): add an innermost "arbitrary" F grid axis + f32 acc scratch for F*o_tile too large for one VMEM tile.
    # TODO(synk): add a parallel B grid axis when the batch is large enough to dominate the x/out VMEM tiles.
    return dict(path="mxu", w=w_p, b=b_p, B=B, Bp=Bp, C=C, O=O, Op=Op, o_tile=o_tile,
                L=L, K=K, F=F, Fp=Fp, stride=stride, l_tile=l_tile, Lp=Lp,
                stream_dtype=stream_dtype, vmem_limit=vmem_limit)


# --------------------------------------------------------------------------------------
# Forward (per-call work: im2col of x + pallas_call)
# --------------------------------------------------------------------------------------

def apply_locally_connected_1d(params, x):
    p = params
    B, C, W = x.shape
    K, stride, L, F = p["K"], p["stride"], p["L"], p["F"]
    assert B == p["B"] and C == p["C"]
    assert L == (W - K) // stride + 1
    out_dtype = x.dtype
    sd = p["stream_dtype"]

    # im2col in the wrapper (pure layout plumbing): f = c*K + j
    x_unf = jnp.stack(
        [x[:, :, j: j + (L - 1) * stride + 1: stride] for j in range(K)], axis=-1
    )  # (B, C, L, K)

    if p["path"] == "vpu":
        O, l_tile, Lp = p["O"], p["l_tile"], p["Lp"]
        x_r = jnp.transpose(x_unf, (1, 3, 0, 2)).reshape(F, B, L).astype(sd)
        x_p = jnp.pad(x_r, ((0, 0), (0, 0), (0, Lp - L)))
        cost = pl.CostEstimate(
            flops=int(2 * B * O * L * F), transcendentals=0,
            bytes_accessed=int(x_p.size * x_p.dtype.itemsize
                               + p["w"].size * p["w"].dtype.itemsize
                               + p["b"].size * p["b"].dtype.itemsize
                               + B * O * Lp * out_dtype.itemsize))
        out_p = pl.pallas_call(
            _lc1d_vpu_kernel,
            out_shape=jax.ShapeDtypeStruct((B, O, Lp), out_dtype),
            grid=(Lp // l_tile,),
            in_specs=[
                pl.BlockSpec((F, B, l_tile), lambda l: (0, 0, l)),   # x (F, B, L)
                pl.BlockSpec((F, O, l_tile), lambda l: (0, 0, l)),   # weight (F, O, L)
                pl.BlockSpec((O, l_tile), lambda l: (0, l)),         # bias (O, L)
            ],
            out_specs=pl.BlockSpec((B, O, l_tile), lambda l: (0, 0, l)),
            compiler_params=pltpu.CompilerParams(
                dimension_semantics=("parallel",),
                vmem_limit_bytes=p["vmem_limit"]),
            cost_estimate=cost,
        )(x_p, p["w"], p["b"])
        return out_p[:, :, :L]                                        # already (B, O, L)

    # MXU path
    O, Op, o_tile = p["O"], p["Op"], p["o_tile"]
    Bp, Fp, l_tile, Lp = p["Bp"], p["Fp"], p["l_tile"], p["Lp"]
    x_r = jnp.transpose(x_unf, (2, 0, 1, 3)).reshape(L, B, F).astype(sd)
    x_p = jnp.pad(x_r, ((0, Lp - L), (0, Bp - B), (0, Fp - F)))
    cost = pl.CostEstimate(
        flops=int(2 * B * O * L * F), transcendentals=0,
        bytes_accessed=int(x_p.size * x_p.dtype.itemsize
                           + p["w"].size * p["w"].dtype.itemsize
                           + p["b"].size * p["b"].dtype.itemsize
                           + Lp * Bp * Op * out_dtype.itemsize))
    out_p = pl.pallas_call(
        _lc1d_mxu_kernel,
        out_shape=jax.ShapeDtypeStruct((Lp, Bp, Op), out_dtype),
        grid=(Lp // l_tile, Op // o_tile),
        in_specs=[
            pl.BlockSpec((l_tile, Bp, Fp), lambda l, o: (l, 0, 0)),      # x tile
            pl.BlockSpec((l_tile, Fp, o_tile), lambda l, o: (l, 0, o)),  # weight slice
            pl.BlockSpec((l_tile, o_tile), lambda l, o: (l, o)),         # bias slice
        ],
        out_specs=pl.BlockSpec((l_tile, Bp, o_tile), lambda l, o: (l, 0, o)),
        compiler_params=pltpu.CompilerParams(
            dimension_semantics=("parallel", "parallel"),
            vmem_limit_bytes=p["vmem_limit"]),
        cost_estimate=cost,
    )(x_p, p["w"], p["b"])
    return jnp.transpose(out_p[:L, :B, :O], (1, 2, 0))                   # -> (B, O, L)


def locally_connected_1d(x, weight, bias, *, kernel_size, stride, stream_dtype=None):
    """Convenience one-shot wrapper (prefer prepare_* + apply_* to cache the weight)."""
    params = prepare_locally_connected_1d(
        weight, bias, kernel_size=kernel_size, stride=stride,
        batch_size=x.shape[0], stream_dtype=stream_dtype)
    return apply_locally_connected_1d(params, x)


# --------------------------------------------------------------------------------------
# Pure-JAX reference (mirrors the PyTorch forward: unfold -> broadcast mul -> sum)
# --------------------------------------------------------------------------------------

def _reference(x, weight, bias, *, kernel_size, stride):
    B, C, W = x.shape
    L = (W - kernel_size) // stride + 1
    x_unf = jnp.stack(
        [x[:, :, j: j + (L - 1) * stride + 1: stride] for j in range(kernel_size)],
        axis=-1,
    )  # (B, C, L, K)
    out = (x_unf[:, None] * weight).sum(axis=(2, -1))  # (B, O, L)
    return out + bias


if __name__ == "__main__":
    key = jax.random.PRNGKey(0)

    def make_case(k, B, C, O, W, K, s):
        L = (W - K) // s + 1
        kx, kw, kb = jax.random.split(k, 3)
        # torch kaiming_uniform_(a=sqrt(5)) on the 5-D weight: fan_in = C * K
        fan_in = C * K
        gain = math.sqrt(2.0 / (1.0 + 5.0))
        w_bound = math.sqrt(3.0) * gain / math.sqrt(fan_in)
        b_bound = 1.0 / math.sqrt(fan_in)
        weight = jax.random.uniform(kw, (1, O, C, L, K), dtype=jnp.float32,
                                    minval=-w_bound, maxval=w_bound)
        bias = jax.random.uniform(kb, (1, O, L), dtype=jnp.float32,
                                  minval=-b_bound, maxval=b_bound)
        x = jax.random.normal(kx, (B, C, W), dtype=jnp.float32)
        return x, weight, bias, L

    k1, k2 = jax.random.split(key)

    # Case 1: module defaults (small C*K, O) -> VPU / L-in-lanes path, f32 streams.
    B, C, O, W, K, s = 2, 4, 8, 16, 3, 1
    x, weight, bias, L = make_case(k1, B, C, O, W, K, s)
    params = prepare_locally_connected_1d(weight, bias, kernel_size=K, stride=s,
                                          batch_size=B)
    out = jax.block_until_ready(apply_locally_connected_1d(params, x))
    ref = _reference(x, weight, bias, kernel_size=K, stride=s)
    assert out.shape == (B, O, L)
    assert jnp.allclose(out, ref, atol=1e-4, rtol=1e-4), "VPU-path mismatch vs reference"

    # Case 1b: same shapes, bf16-streamed weight/activations (f32 accumulation).
    params_bf16 = prepare_locally_connected_1d(weight, bias, kernel_size=K, stride=s,
                                               batch_size=B, stream_dtype=jnp.bfloat16)
    out_bf16 = jax.block_until_ready(apply_locally_connected_1d(params_bf16, x))
    assert jnp.allclose(out_bf16, ref, atol=5e-2, rtol=5e-2), "bf16-stream mismatch"

    # Case 2: larger C*K -> MXU (batched-matmul-over-L) path; stride 2, unaligned sizes.
    B2, C2, O2, W2, K2, s2 = 3, 31, 16, 23, 5, 2
    x2, weight2, bias2, L2 = make_case(k2, B2, C2, O2, W2, K2, s2)
    params2 = prepare_locally_connected_1d(weight2, bias2, kernel_size=K2, stride=s2,
                                           batch_size=B2)
    out2 = jax.block_until_ready(apply_locally_connected_1d(params2, x2))
    ref2 = _reference(x2, weight2, bias2, kernel_size=K2, stride=s2)
    assert out2.shape == (B2, O2, L2)
    assert jnp.allclose(out2, ref2, atol=2e-2, rtol=2e-2), "MXU-path mismatch vs reference"

    print("KERNEL_OK")
</pallas_src>

<mosaic_0001>
module attributes {stable_mosaic.version = 11 : i64} {
  func.func @_lc1d_vpu_kernel(%arg0: i32, %arg1: memref<12x2x14xf32, #tpu.memory_space<vmem>>, %arg2: memref<12x8x14xf32, #tpu.memory_space<vmem>>, %arg3: memref<8x14xf32, #tpu.memory_space<vmem>>, %arg4: memref<2x8x14xf32, #tpu.memory_space<vmem>>) attributes {dimension_semantics = [#tpu.dimension_semantics<parallel>], iteration_bounds = array<i64: 1>, scalar_prefetch = 0 : i64, scratch_operands = 0 : i64, tpu.core_type = #tpu.core_type<tc>, window_params = [{transform_indices = @transform_0, window_bounds = array<i64: 12, 2, 14>}, {transform_indices = @transform_1, window_bounds = array<i64: 12, 8, 14>}, {transform_indices = @transform_2, window_bounds = array<i64: 8, 14>}, {transform_indices = @transform_3, window_bounds = array<i64: 2, 8, 14>}]} {
    %c0 = arith.constant 0 : index
    %c0_0 = arith.constant 0 : index
    %c0_1 = arith.constant 0 : index
    %0 = vector.load %arg1[%c0, %c0_0, %c0_1] : memref<12x2x14xf32, #tpu.memory_space<vmem>>, vector<12x2x14xf32>
    %c0_2 = arith.constant 0 : index
    %c0_3 = arith.constant 0 : index
    %c0_4 = arith.constant 0 : index
    %1 = vector.load %arg2[%c0_2, %c0_3, %c0_4] : memref<12x8x14xf32, #tpu.memory_space<vmem>>, vector<12x8x14xf32>
    %cst = arith.constant 0.000000e+00 : f32
    %2 = vector.broadcast %cst : f32 to vector<2x8x14xf32>
    %c0_5 = arith.constant 0 : index
    %c0_6 = arith.constant 0 : index
    %3 = vector.load %arg3[%c0_5, %c0_6] : memref<8x14xf32, #tpu.memory_space<vmem>>, vector<8x14xf32>
    %4 = vector.shape_cast %3 : vector<8x14xf32> to vector<1x8x14xf32>
    %5 = vector.broadcast %4 : vector<1x8x14xf32> to vector<2x8x14xf32>
    %6 = arith.addf %2, %5 : vector<2x8x14xf32>
    %7 = vector.extract_strided_slice %0 {offsets = [0, 0, 0], sizes = [1, 2, 14], strides = [1, 1, 1]} : vector<12x2x14xf32> to vector<1x2x14xf32>
    %8 = vector.shape_cast %7 : vector<1x2x14xf32> to vector<2x14xf32>
    %9 = vector.shape_cast %8 : vector<2x14xf32> to vector<2x1x14xf32>
    %10 = vector.extract_strided_slice %1 {offsets = [0, 0, 0], sizes = [1, 8, 14], strides = [1, 1, 1]} : vector<12x8x14xf32> to vector<1x8x14xf32>
    %11 = vector.shape_cast %10 : vector<1x8x14xf32> to vector<8x14xf32>
    %12 = vector.shape_cast %11 : vector<8x14xf32> to vector<1x8x14xf32>
    %13 = vector.broadcast %9 : vector<2x1x14xf32> to vector<2x8x14xf32>
    %14 = vector.broadcast %12 : vector<1x8x14xf32> to vector<2x8x14xf32>
    %15 = arith.mulf %13, %14 : vector<2x8x14xf32>
    %16 = arith.addf %6, %15 : vector<2x8x14xf32>
    %17 = vector.extract_strided_slice %0 {offsets = [1, 0, 0], sizes = [1, 2, 14], strides = [1, 1, 1]} : vector<12x2x14xf32> to vector<1x2x14xf32>
    %18 = vector.shape_cast %17 : vector<1x2x14xf32> to vector<2x14xf32>
    %19 = vector.shape_cast %18 : vector<2x14xf32> to vector<2x1x14xf32>
    %20 = vector.extract_strided_slice %1 {offsets = [1, 0, 0], sizes = [1, 8, 14], strides = [1, 1, 1]} : vector<12x8x14xf32> to vector<1x8x14xf32>
    %21 = vector.shape_cast %20 : vector<1x8x14xf32> to vector<8x14xf32>
    %22 = vector.shape_cast %21 : vector<8x14xf32> to vector<1x8x14xf32>
    %23 = vector.broadcast %19 : vector<2x1x14xf32> to vector<2x8x14xf32>
    %24 = vector.broadcast %22 : vector<1x8x14xf32> to vector<2x8x14xf32>
    %25 = arith.mulf %23, %24 : vector<2x8x14xf32>
    %26 = arith.addf %16, %25 : vector<2x8x14xf32>
    %27 = vector.extract_strided_slice %0 {offsets = [2, 0, 0], sizes = [1, 2, 14], strides = [1, 1, 1]} : vector<12x2x14xf32> to vector<1x2x14xf32>
    %28 = vector.shape_cast %27 : vector<1x2x14xf32> to vector<2x14xf32>
    %29 = vector.shape_cast %28 : vector<2x14xf32> to vector<2x1x14xf32>
    %30 = vector.extract_strided_slice %1 {offsets = [2, 0, 0], sizes = [1, 8, 14], strides = [1, 1, 1]} : vector<12x8x14xf32> to vector<1x8x14xf32>
    %31 = vector.shape_cast %30 : vector<1x8x14xf32> to vector<8x14xf32>
    %32 = vector.shape_cast %31 : vector<8x14xf32> to vector<1x8x14xf32>
    %33 = vector.broadcast %29 : vector<2x1x14xf32> to vector<2x8x14xf32>
    %34 = vector.broadcast %32 : vector<1x8x14xf32> to vector<2x8x14xf32>
    %35 = arith.mulf %33, %34 : vector<2x8x14xf32>
    %36 = arith.addf %26, %35 : vector<2x8x14xf32>
    %37 = vector.extract_strided_slice %0 {offsets = [3, 0, 0], sizes = [1, 2, 14], strides = [1, 1, 1]} : vector<12x2x14xf32> to vector<1x2x14xf32>
    %38 = vector.shape_cast %37 : vector<1x2x14xf32> to vector<2x14xf32>
    %39 = vector.shape_cast %38 : vector<2x14xf32> to vector<2x1x14xf32>
    %40 = vector.extract_strided_slice %1 {offsets = [3, 0, 0], sizes = [1, 8, 14], strides = [1, 1, 1]} : vector<12x8x14xf32> to vector<1x8x14xf32>
    %41 = vector.shape_cast %40 : vector<1x8x14xf32> to vector<8x14xf32>
    %42 = vector.shape_cast %41 : vector<8x14xf32> to vector<1x8x14xf32>
    %43 = vector.broadcast %39 : vector<2x1x14xf32> to vector<2x8x14xf32>
    %44 = vector.broadcast %42 : vector<1x8x14xf32> to vector<2x8x14xf32>
    %45 = arith.mulf %43, %44 : vector<2x8x14xf32>
    %46 = arith.addf %36, %45 : vector<2x8x14xf32>
    %47 = vector.extract_strided_slice %0 {offsets = [4, 0, 0], sizes = [1, 2, 14], strides = [1, 1, 1]} : vector<12x2x14xf32> to vector<1x2x14xf32>
    %48 = vector.shape_cast %47 : vector<1x2x14xf32> to vector<2x14xf32>
    %49 = vector.shape_cast %48 : vector<2x14xf32> to vector<2x1x14xf32>
    %50 = vector.extract_strided_slice %1 {offsets = [4, 0, 0], sizes = [1, 8, 14], strides = [1, 1, 1]} : vector<12x8x14xf32> to vector<1x8x14xf32>
    %51 = vector.shape_cast %50 : vector<1x8x14xf32> to vector<8x14xf32>
    %52 = vector.shape_cast %51 : vector<8x14xf32> to vector<1x8x14xf32>
    %53 = vector.broadcast %49 : vector<2x1x14xf32> to vector<2x8x14xf32>
    %54 = vector.broadcast %52 : vector<1x8x14xf32> to vector<2x8x14xf32>
    %55 = arith.mulf %53, %54 : vector<2x8x14xf32>
    %56 = arith.addf %46, %55 : vector<2x8x14xf32>
    %57 = vector.extract_strided_slice %0 {offsets = [5, 0, 0], sizes = [1, 2, 14], strides = [1, 1, 1]} : vector<12x2x14xf32> to vector<1x2x14xf32>
    %58 = vector.shape_cast %57 : vector<1x2x14xf32> to vector<2x14xf32>
    %59 = vector.shape_cast %58 : vector<2x14xf32> to vector<2x1x14xf32>
    %60 = vector.extract_strided_slice %1 {offsets = [5, 0, 0], sizes = [1, 8, 14], strides = [1, 1, 1]} : vector<12x8x14xf32> to vector<1x8x14xf32>
    %61 = vector.shape_cast %60 : vector<1x8x14xf32> to vector<8x14xf32>
    %62 = vector.shape_cast %61 : vector<8x14xf32> to vector<1x8x14xf32>
    %63 = vector.broadcast %59 : vector<2x1x14xf32> to vector<2x8x14xf32>
    %64 = vector.broadcast %62 : vector<1x8x14xf32> to vector<2x8x14xf32>
    %65 = arith.mulf %63, %64 : vector<2x8x14xf32>
    %66 = arith.addf %56, %65 : vector<2x8x14xf32>
    %67 = vector.extract_strided_slice %0 {offsets = [6, 0, 0], sizes = [1, 2, 14], strides = [1, 1, 1]} : vector<12x2x14xf32> to vector<1x2x14xf32>
    %68 = vector.shape_cast %67 : vector<1x2x14xf32> to vector<2x14xf32>
    %69 = vector.shape_cast %68 : vector<2x14xf32> to vector<2x1x14xf32>
    %70 = vector.extract_strided_slice %1 {offsets = [6, 0, 0], sizes = [1, 8, 14], strides = [1, 1, 1]} : vector<12x8x14xf32> to vector<1x8x14xf32>
    %71 = vector.shape_cast %70 : vector<1x8x14xf32> to vector<8x14xf32>
    %72 = vector.shape_cast %71 : vector<8x14xf32> to vector<1x8x14xf32>
    %73 = vector.broadcast %69 : vector<2x1x14xf32> to vector<2x8x14xf32>
    %74 = vector.broadcast %72 : vector<1x8x14xf32> to vector<2x8x14xf32>
    %75 = arith.mulf %73, %74 : vector<2x8x14xf32>
    %76 = arith.addf %66, %75 : vector<2x8x14xf32>
    %77 = vector.extract_strided_slice %0 {offsets = [7, 0, 0], sizes = [1, 2, 14], strides = [1, 1, 1]} : vector<12x2x14xf32> to vector<1x2x14xf32>
    %78 = vector.shape_cast %77 : vector<1x2x14xf32> to vector<2x14xf32>
    %79 = vector.shape_cast %78 : vector<2x14xf32> to vector<2x1x14xf32>
    %80 = vector.extract_strided_slice %1 {offsets = [7, 0, 0], sizes = [1, 8, 14], strides = [1, 1, 1]} : vector<12x8x14xf32> to vector<1x8x14xf32>
    %81 = vector.shape_cast %80 : vector<1x8x14xf32> to vector<8x14xf32>
    %82 = vector.shape_cast %81 : vector<8x14xf32> to vector<1x8x14xf32>
    %83 = vector.broadcast %79 : vector<2x1x14xf32> to vector<2x8x14xf32>
    %84 = vector.broadcast %82 : vector<1x8x14xf32> to vector<2x8x14xf32>
    %85 = arith.mulf %83, %84 : vector<2x8x14xf32>
    %86 = arith.addf %76, %85 : vector<2x8x14xf32>
    %87 = vector.extract_strided_slice %0 {offsets = [8, 0, 0], sizes = [1, 2, 14], strides = [1, 1, 1]} : vector<12x2x14xf32> to vector<1x2x14xf32>
    %88 = vector.shape_cast %87 : vector<1x2x14xf32> to vector<2x14xf32>
    %89 = vector.shape_cast %88 : vector<2x14xf32> to vector<2x1x14xf32>
    %90 = vector.extract_strided_slice %1 {offsets = [8, 0, 0], sizes = [1, 8, 14], strides = [1, 1, 1]} : vector<12x8x14xf32> to vector<1x8x14xf32>
    %91 = vector.shape_cast %90 : vector<1x8x14xf32> to vector<8x14xf32>
    %92 = vector.shape_cast %91 : vector<8x14xf32> to vector<1x8x14xf32>
    %93 = vector.broadcast %89 : vector<2x1x14xf32> to vector<2x8x14xf32>
    %94 = vector.broadcast %92 : vector<1x8x14xf32> to vector<2x8x14xf32>
    %95 = arith.mulf %93, %94 : vector<2x8x14xf32>
    %96 = arith.addf %86, %95 : vector<2x8x14xf32>
    %97 = vector.extract_strided_slice %0 {offsets = [9, 0, 0], sizes = [1, 2, 14], strides = [1, 1, 1]} : vector<12x2x14xf32> to vector<1x2x14xf32>
    %98 = vector.shape_cast %97 : vector<1x2x14xf32> to vector<2x14xf32>
    %99 = vector.shape_cast %98 : vector<2x14xf32> to vector<2x1x14xf32>
    %100 = vector.extract_strided_slice %1 {offsets = [9, 0, 0], sizes = [1, 8, 14], strides = [1, 1, 1]} : vector<12x8x14xf32> to vector<1x8x14xf32>
    %101 = vector.shape_cast %100 : vector<1x8x14xf32> to vector<8x14xf32>
    %102 = vector.shape_cast %101 : vector<8x14xf32> to vector<1x8x14xf32>
    %103 = vector.broadcast %99 : vector<2x1x14xf32> to vector<2x8x14xf32>
    %104 = vector.broadcast %102 : vector<1x8x14xf32> to vector<2x8x14xf32>
    %105 = arith.mulf %103, %104 : vector<2x8x14xf32>
    %106 = arith.addf %96, %105 : vector<2x8x14xf32>
    %107 = vector.extract_strided_slice %0 {offsets = [10, 0, 0], sizes = [1, 2, 14], strides = [1, 1, 1]} : vector<12x2x14xf32> to vector<1x2x14xf32>
    %108 = vector.shape_cast %107 : vector<1x2x14xf32> to vector<2x14xf32>
    %109 = vector.shape_cast %108 : vector<2x14xf32> to vector<2x1x14xf32>
    %110 = vector.extract_strided_slice %1 {offsets = [10, 0, 0], sizes = [1, 8, 14], strides = [1, 1, 1]} : vector<12x8x14xf32> to vector<1x8x14xf32>
    %111 = vector.shape_cast %110 : vector<1x8x14xf32> to vector<8x14xf32>
    %112 = vector.shape_cast %111 : vector<8x14xf32> to vector<1x8x14xf32>
    %113 = vector.broadcast %109 : vector<2x1x14xf32> to vector<2x8x14xf32>
    %114 = vector.broadcast %112 : vector<1x8x14xf32> to vector<2x8x14xf32>
    %115 = arith.mulf %113, %114 : vector<2x8x14xf32>
    %116 = arith.addf %106, %115 : vector<2x8x14xf32>
    %117 = vector.extract_strided_slice %0 {offsets = [11, 0, 0], sizes = [1, 2, 14], strides = [1, 1, 1]} : vector<12x2x14xf32> to vector<1x2x14xf32>
    %118 = vector.shape_cast %117 : vector<1x2x14xf32> to vector<2x14xf32>
    %119 = vector.shape_cast %118 : vector<2x14xf32> to vector<2x1x14xf32>
    %120 = vector.extract_strided_slice %1 {offsets = [11, 0, 0], sizes = [1, 8, 14], strides = [1, 1, 1]} : vector<12x8x14xf32> to vector<1x8x14xf32>
    %121 = vector.shape_cast %120 : vector<1x8x14xf32> to vector<8x14xf32>
    %122 = vector.shape_cast %121 : vector<8x14xf32> to vector<1x8x14xf32>
    %123 = vector.broadcast %119 : vector<2x1x14xf32> to vector<2x8x14xf32>
    %124 = vector.broadcast %122 : vector<1x8x14xf32> to vector<2x8x14xf32>
    %125 = arith.mulf %123, %124 : vector<2x8x14xf32>
    %126 = arith.addf %116, %125 : vector<2x8x14xf32>
    %c0_7 = arith.constant 0 : index
    %c0_8 = arith.constant 0 : index
    %c0_9 = arith.constant 0 : index
    %127 = vector.load %arg4[%c0_7, %c0_8, %c0_9] : memref<2x8x14xf32, #tpu.memory_space<vmem>>, vector<2x8x14xf32>
    tpu.vector_store %arg4[%c0_7, %c0_8, %c0_9], %126 {strides = array<i32>} : memref<2x8x14xf32, #tpu.memory_space<vmem>>, vector<2x8x14xf32>,
    return
  }
  func.func @transform_0(%arg0: i32) -> (i32, i32, i32) {
    %c0_i32 = arith.constant 0 : i32
    %c0_i32_0 = arith.constant 0 : i32
    %c0_i32_1 = arith.constant 0 : i32
    return %c0_i32, %c0_i32_0, %arg0 : i32, i32, i32
  }
  func.func @transform_1(%arg0: i32) -> (i32, i32, i32) {
    %c0_i32 = arith.constant 0 : i32
    %c0_i32_0 = arith.constant 0 : i32
    %c0_i32_1 = arith.constant 0 : i32
    return %c0_i32, %c0_i32_0, %arg0 : i32, i32, i32
  }
  func.func @transform_2(%arg0: i32) -> (i32, i32) {
    %c0_i32 = arith.constant 0 : i32
    %c0_i32_0 = arith.constant 0 : i32
    return %c0_i32, %arg0 : i32, i32
  }
  func.func @transform_3(%arg0: i32) -> (i32, i32, i32) {
    %c0_i32 = arith.constant 0 : i32
    %c0_i32_0 = arith.constant 0 : i32
    %c0_i32_1 = arith.constant 0 : i32
    return %c0_i32, %c0_i32_0, %arg0 : i32, i32, i32
  }
}

</mosaic_0001>

<llo_original>
// kernel: tpu_custom_call.1
$region0: #{tpu_custom_call.1}
  #allocation0 [shape = 'u32[]', space=smem, size = 0x4, offset = 0x4, fixed_abs, tag = 'smem constant byte address 0x4 - core index']
  #allocation1 [shape = 'u32[72,128]{1,0:T(1,128)}', space=vmem, size = 0x9000, scoped, tag = 'internal scratch']
  %s0 = inlined_call_operand.hbm [shape: f32[12,2,14], index: 0, kind: input, shape index: {}]
  %s1 = inlined_call_operand.hbm [shape: f32[12,8,14], index: 1, kind: input, shape index: {}]
  %s2 = inlined_call_operand.hbm [shape: f32[8,14], index: 2, kind: input, shape index: {}]
  %s3 = inlined_call_operand.hbm [shape: f32[2,8,14], index: 3, kind: output, shape index: {}]
  %s4 = sld [smem:[#allocation0]]
  $region34: #{tpu_custom_call.1} parent=0
    _
  %s6 = ssub.s32 1, %s4
  %s7 = scalar_select 0, %s6, %s4
  $region1: #{tpu_custom_call.1} parent=0
    #allocation2 [shape = 'u8[12288]{0}', space=vmem, size = 0x3000, scoped, tag = 'input window, operand 0, single buffered']
    #allocation3 [shape = 's32[1]{0}', space=sflag, size = 0x4, scoped, tag = 'scoped memory for tpu_custom_call.1']
    #allocation4 [shape = 's32[1]{0}', space=sflag, size = 0x4, scoped, tag = 'scoped memory for tpu_custom_call.1']
    #allocation5 [shape = 'u8[49152]{0}', space=vmem, size = 0xc000, scoped, tag = 'input window, operand 1, single buffered']
    #allocation6 [shape = 's32[1]{0}', space=sflag, size = 0x4, scoped, tag = 'scoped memory for tpu_custom_call.1']
    #allocation7 [shape = 'u8[4096]{0}', space=vmem, size = 0x1000, scoped, tag = 'input window, operand 2, single buffered']
    #allocation8 [shape = 'u8[8192]{0}', space=vmem, size = 0x2000, scoped, tag = 'output window, operand 0, single buffered']
    %8 = vsyncpa [#allocation3], 0
    %9 = vsyncpa [#allocation6], 0
    %10 = vsyncpa [#allocation4], 0
    // Predicated region
    $region2: #{tpu_custom_call.1} parent=1 // pred_check
      _
    $region3: #{tpu_custom_call.1} parent=1 // pred_check_branch
      %12 = sbr.rel (0) target = $region5
    $region4: #{tpu_custom_call.1} parent=1 // pred_region
      %14 = vsyncadd [#allocation3], 0
      %s15 = sshll.u32 %s0, 4
      %s16 = int_to_ptr.hbm [resolvable:$true] %s15
      %s17 = sshll.u32 [#allocation2], 4
      %s18 = int_to_ptr.vmem [resolvable:$true] %s17
      %23 = dma.hbm_to_vmem [thread:$0]  %s16, 384, %s18, [#allocation3], 32, 32, 2
    $region5: #{tpu_custom_call.1} parent=1 // pred_fallthru
      _
    // Predicated region
    $region6: #{tpu_custom_call.1} parent=1 // pred_check
      _
    $region7: #{tpu_custom_call.1} parent=1 // pred_check_branch
      %25 = sbr.rel (0) target = $region9
    $region8: #{tpu_custom_call.1} parent=1 // pred_region
      %27 = vsyncadd [#allocation6], 0
      %s28 = sshll.u32 %s1, 4
      %s29 = int_to_ptr.hbm [resolvable:$true] %s28
      %s30 = sshll.u32 [#allocation5], 4
      %s31 = int_to_ptr.vmem [resolvable:$true] %s30
      %36 = dma.hbm_to_vmem [thread:$0]  %s29, 1536, %s31, [#allocation6], 128, 128, 8
    $region9: #{tpu_custom_call.1} parent=1 // pred_fallthru
      _
    // Predicated region
    $region10: #{tpu_custom_call.1} parent=1 // pred_check
      _
    $region11: #{tpu_custom_call.1} parent=1 // pred_check_branch
      %38 = sbr.rel (0) target = $region13
    $region12: #{tpu_custom_call.1} parent=1 // pred_region
      %40 = vsyncadd [#allocation6], 0
      %s42 = sshll.u32 %s2, 4
      %s43 = int_to_ptr.hbm [resolvable:$true] %s42
      %s44 = sshll.u32 [#allocation7], 4
      %s45 = int_to_ptr.vmem [resolvable:$true] %s44
      %47 = dma.hbm_to_vmem [thread:$0]  %s43, 128, %s45, [#allocation6]
    $region13: #{tpu_custom_call.1} parent=1 // pred_fallthru
      _
    // Predicated region
    $region14: #{tpu_custom_call.1} parent=1 // pred_check
      _
    $region15: #{tpu_custom_call.1} parent=1 // pred_check_branch
      %49 = sbr.rel (0) target = $region17
    $region16: #{tpu_custom_call.1} parent=1 // pred_region
      %51 = dma.done [#allocation3], 384
    $region17: #{tpu_custom_call.1} parent=1 // pred_fallthru
      _
    // Predicated region
    $region18: #{tpu_custom_call.1} parent=1 // pred_check
      _
    $region19: #{tpu_custom_call.1} parent=1 // pred_check_branch
      %53 = sbr.rel (0) target = $region21
    $region20: #{tpu_custom_call.1} parent=1 // pred_region
      %55 = dma.done [#allocation6], 1536
    $region21: #{tpu_custom_call.1} parent=1 // pred_fallthru
      _
    // Predicated region
    $region22: #{tpu_custom_call.1} parent=1 // pred_check
      _
    $region23: #{tpu_custom_call.1} parent=1 // pred_check_branch
      %57 = sbr.rel (0) target = $region25
    $region24: #{tpu_custom_call.1} parent=1 // pred_region
      %59 = dma.done [#allocation6], 128
    $region25: #{tpu_custom_call.1} parent=1 // pred_fallthru
      _
    %v60 = vld [vmem:[#allocation2] sm:$0x3]
    %v61 = vld [vmem:[#allocation2 + $0x2] sm:$0x3]
    %v62 = vld [vmem:[#allocation2 + $0x4] sm:$0x3]
    %v63 = vld [vmem:[#allocation2 + $0x6] sm:$0x3]
    %v64 = vld [vmem:[#allocation2 + $0x8] sm:$0x3]
    %v65 = vld [vmem:[#allocation2 + $0xa] sm:$0x3]
    %v66 = vld [vmem:[#allocation2 + $0xc] sm:$0x3]
    %v67 = vld [vmem:[#allocation2 + $0xe] sm:$0x3]
    %v68 = vld [vmem:[#allocation2 + $0x10] sm:$0x3]
    %v69 = vld [vmem:[#allocation2 + $0x12] sm:$0x3]
    %v70 = vld [vmem:[#allocation2 + $0x14] sm:$0x3]
    %v71 = vld [vmem:[#allocation2 + $0x16] sm:$0x3]
    %v72 = vld [vmem:[#allocation5] sm:$0xff]
    %v73 = vld [vmem:[#allocation5 + $0x8] sm:$0xff]
    %v74 = vld [vmem:[#allocation5 + $0x10] sm:$0xff]
    %v75 = vld [vmem:[#allocation5 + $0x18] sm:$0xff]
    %v76 = vld [vmem:[#allocation5 + $0x20] sm:$0xff]
    %v77 = vld [vmem:[#allocation5 + $0x28] sm:$0xff]
    %v78 = vld [vmem:[#allocation5 + $0x30] sm:$0xff]
    %v79 = vld [vmem:[#allocation5 + $0x38] sm:$0xff]
    %v80 = vld [vmem:[#allocation5 + $0x40] sm:$0xff]
    %v81 = vld [vmem:[#allocation5 + $0x48] sm:$0xff]
    %v82 = vld [vmem:[#allocation5 + $0x50] sm:$0xff]
    %v83 = vld [vmem:[#allocation5 + $0x58] sm:$0xff]
    %v84 = vld [vmem:[#allocation7] sm:$0xff]
    %v85 = vadd.f32 %v84, 0.0
    %v87 = vrot.slane %v60, 1
    %v88 = vperm.slane %v60, 0
    %v89 = vperm.slane %v87, 0
    %v92 = vmul.f32 %v88, %v72
    %v93 = vmul.f32 %v89, %v72
    %v94 = vadd.f32 %v85, %v92
    %v95 = vadd.f32 %v85, %v93
    %v97 = vrot.slane %v61, 1
    %v98 = vperm.slane %v61, 0
    %v99 = vperm.slane %v97, 0
    %v102 = vmul.f32 %v98, %v73
    %v103 = vmul.f32 %v99, %v73
    %v104 = vadd.f32 %v94, %v102
    %v105 = vadd.f32 %v95, %v103
    %v107 = vrot.slane %v62, 1
    %v108 = vperm.slane %v62, 0
    %v109 = vperm.slane %v107, 0
    %v112 = vmul.f32 %v108, %v74
    %v113 = vmul.f32 %v109, %v74
    %v114 = vadd.f32 %v104, %v112
    %v115 = vadd.f32 %v105, %v113
    %v117 = vrot.slane %v63, 1
    %v118 = vperm.slane %v63, 0
    %v119 = vperm.slane %v117, 0
    %v122 = vmul.f32 %v118, %v75
    %v123 = vmul.f32 %v119, %v75
    %v124 = vadd.f32 %v114, %v122
    %v125 = vadd.f32 %v115, %v123
    %v127 = vrot.slane %v64, 1
    %v128 = vperm.slane %v64, 0
    %v129 = vperm.slane %v127, 0
    %v132 = vmul.f32 %v128, %v76
    %v133 = vmul.f32 %v129, %v76
    %v134 = vadd.f32 %v124, %v132
    %v135 = vadd.f32 %v125, %v133
    %v137 = vrot.slane %v65, 1
    %v138 = vperm.slane %v65, 0
    %v139 = vperm.slane %v137, 0
    %v142 = vmul.f32 %v138, %v77
    %v143 = vmul.f32 %v139, %v77
    %v144 = vadd.f32 %v134, %v142
    %v145 = vadd.f32 %v135, %v143
    %v147 = vrot.slane %v66, 1
    %v148 = vperm.slane %v66, 0
    %v149 = vperm.slane %v147, 0
    %v152 = vmul.f32 %v148, %v78
    %v153 = vmul.f32 %v149, %v78
    %v154 = vadd.f32 %v144, %v152
    %v155 = vadd.f32 %v145, %v153
    %v157 = vrot.slane %v67, 1
    %v158 = vperm.slane %v67, 0
    %v159 = vperm.slane %v157, 0
    %v162 = vmul.f32 %v158, %v79
    %v163 = vmul.f32 %v159, %v79
    %v164 = vadd.f32 %v154, %v162
    %v165 = vadd.f32 %v155, %v163
    %v167 = vrot.slane %v68, 1
    %v168 = vperm.slane %v68, 0
    %v169 = vperm.slane %v167, 0
    %v172 = vmul.f32 %v168, %v80
    %v173 = vmul.f32 %v169, %v80
    %v174 = vadd.f32 %v164, %v172
    %v175 = vadd.f32 %v165, %v173
    %v177 = vrot.slane %v69, 1
    %v178 = vperm.slane %v69, 0
    %v179 = vperm.slane %v177, 0
    %v182 = vmul.f32 %v178, %v81
    %v183 = vmul.f32 %v179, %v81
    %v184 = vadd.f32 %v174, %v182
    %v185 = vadd.f32 %v175, %v183
    %v187 = vrot.slane %v70, 1
    %v188 = vperm.slane %v70, 0
    %v189 = vperm.slane %v187, 0
    %v192 = vmul.f32 %v188, %v82
    %v193 = vmul.f32 %v189, %v82
    %v194 = vadd.f32 %v184, %v192
    %v195 = vadd.f32 %v185, %v193
    %v197 = vrot.slane %v71, 1
    %v198 = vperm.slane %v71, 0
    %v199 = vperm.slane %v197, 0
    %v202 = vmul.f32 %v198, %v83
    %v203 = vmul.f32 %v199, %v83
    %v204 = vadd.f32 %v194, %v202
    %v205 = vadd.f32 %v195, %v203
    %vm206 = vcmask 113664
    %207 = vst.msk [vmem:[#allocation8] sm:$0xff] %vm206, %v204
    %208 = vst.msk [vmem:[#allocation8 + $0x8] sm:$0xff] %vm206, %v205
    // Predicated region
    $region26: #{tpu_custom_call.1} parent=1 // pred_check
      _
    $region27: #{tpu_custom_call.1} parent=1 // pred_check_branch
      %210 = sbr.rel (0) target = $region29
    $region28: #{tpu_custom_call.1} parent=1 // pred_region
      %212 = vsyncadd [#allocation4], 0
      %s213 = sshll.u32 [#allocation8], 4
      %s214 = int_to_ptr.vmem [resolvable:$true] %s213
      %s215 = sshll.u32 %s3, 4
      %s216 = int_to_ptr.hbm [resolvable:$true] %s215
      %221 = dma.vmem_to_hbm [thread:$0]  %s214, 256, %s216, [#allocation4], 128, 128, 8
    $region29: #{tpu_custom_call.1} parent=1 // pred_fallthru
      _
    // Predicated region
    $region30: #{tpu_custom_call.1} parent=1 // pred_check
      _
    $region31: #{tpu_custom_call.1} parent=1 // pred_check_branch
      %223 = sbr.rel (0) target = $region33
    $region32: #{tpu_custom_call.1} parent=1 // pred_region
      %225 = dma.done [#allocation4], 256
    $region33: #{tpu_custom_call.1} parent=1 // pred_fallthru
      _
    %226 = vsyncpa [#allocation3], 1
    %227 = vsyncpa [#allocation6], 1
    %228 = vsyncpa [#allocation4], 1

</llo_original>
